<compile_context>
chip_gen: v7x
topology: tpu7x:2x2x1
jax: 0.10.0
libtpu: 0.0.40
codegen_flags: <defaults>
</compile_context>

<pallas_src>
import numpy as np
import jax
import jax.numpy as jnp
from jax.experimental import pallas as pl
from jax.experimental.pallas import tpu as pltpu


def _rope_angle_table(dim: int, max_seq_len: int, theta: float) -> np.ndarray:
    """angle(pos, k) = pos / theta**(2k/dim); identical to get_1d_rotary_pos_embed
    (use_real=False) before the torch.polar call."""
    inv = 1.0 / (theta ** (np.arange(0, dim, 2, dtype=np.float32)[: dim // 2] / dim))
    t = np.arange(max_seq_len, dtype=np.float32)
    return np.outer(t, inv).astype(np.float32)          # (max_seq_len, dim // 2)


def _rope_pack_kernel(tf_ref, hw_ref, out_ref):
    """out[f, j, :] = tf[f, 0, :] + hw[j, :].

    tf (frames) and hw (height(+)width) are zero-padded onto disjoint lane
    segments of the [cos | sin] layout, so a single add reproduces the torch
    expand + concat exactly.  Pure VPU add + dense stores; no transcendentals.
    """
    out_ref[...] = tf_ref[...] + hw_ref[...][None, :, :]


def _frames_per_block(ppf, bytes_per_frame, target_bytes=2 << 20, budget_bytes=5 << 20):
    """Pick frames-per-grid-step: largest divisor of ppf whose output slab fits the
    VMEM budget (double-buffered output + resident hw table < v5e's 16 MiB scoped
    default).  Lets the grid collapse to 1 when everything fits; prefers an even
    grid length (v7x megacore balance) when the slab still reaches target_bytes."""
    fits = [d for d in range(1, ppf + 1)
            if ppf % d == 0 and d * bytes_per_frame <= budget_bytes]
    if not fits:
        return 1  # single frame per step; per-frame slab larger than budget
    best = max(fits)
    even = [d for d in fits
            if (ppf // d) % 2 == 0 and d * bytes_per_frame >= target_bytes]
    if even and (ppf // best) > 1 and (ppf // best) % 2 != 0:
        best = max(even)
    return best


class WanRotaryPosEmbedPallas:
    def __init__(self, attention_head_dim, patch_size, max_seq_len, theta=10000.0):
        self.attention_head_dim = attention_head_dim
        self.patch_size = patch_size
        self.max_seq_len = max_seq_len
        h_dim = w_dim = 2 * (attention_head_dim // 6)
        t_dim = attention_head_dim - h_dim - w_dim
        self.t_half, self.h_half, self.w_half = t_dim // 2, h_dim // 2, w_dim // 2
        self.half_dim = self.t_half + self.h_half + self.w_half    # == head_dim // 2
        # Host precompute of the three tiny 1-D tables, [cos | sin] contiguous
        # halves, zero-padded onto disjoint lane segments.
        self._cs_t = self._padded_cos_sin(
            _rope_angle_table(t_dim, max_seq_len, theta), 0, self.half_dim)
        self._cs_h = self._padded_cos_sin(
            _rope_angle_table(h_dim, max_seq_len, theta), self.t_half, self.half_dim)
        self._cs_w = self._padded_cos_sin(
            _rope_angle_table(w_dim, max_seq_len, theta),
            self.t_half + self.h_half, self.half_dim)
        self._freqs_cache = {}     # (ppf, pph, ppw) -> complex64 (1, 1, N, head_dim//2)

    @staticmethod
    def _padded_cos_sin(angles, seg_start, half_dim):
        """(n, seg_half) angles -> (n, 2*half_dim) with cos in lanes
        [seg_start, seg_start+seg_half) and sin in [half_dim+seg_start, ...);
        zeros everywhere else (zeros, NOT cos(0)=1, so the 3-way add is exact)."""
        n, seg_half = angles.shape
        out = np.zeros((n, 2 * half_dim), np.float32)
        out[:, seg_start:seg_start + seg_half] = np.cos(angles)
        out[:, half_dim + seg_start:half_dim + seg_start + seg_half] = np.sin(angles)
        return out

    def _compute_freqs(self, ppf, pph, ppw):
        assert ppf <= self.max_seq_len and pph <= self.max_seq_len and ppw <= self.max_seq_len, \
            f"patched grid {(ppf, pph, ppw)} exceeds max_seq_len={self.max_seq_len}"
        half = self.half_dim
        L = 2 * half
        HW = pph * ppw

        # One-time host work per shape: hw = th (+) tw, tiny (<= ~1 MB), plus two
        # small H2D copies.  Halves the in-kernel adds and removes the per-step
        # re-materialized (pph, ppw) intermediate.
        hw_host = (self._cs_h[:pph][:, None, :]
                   + self._cs_w[:ppw][None, :, :]).reshape(HW, L)
        tf = jnp.asarray(self._cs_t[:ppf].reshape(ppf, 1, L))     # (ppf, 1, L)
        hw = jnp.asarray(hw_host)                                 # (HW, L)

        bytes_per_frame = HW * L * 4
        fpb = _frames_per_block(ppf, bytes_per_frame)
        grid = (ppf // fpb,)

        # Keep everything under the default scoped VMEM when possible; only raise
        # the limit for very large per-frame slabs.
        est_vmem = 2 * (fpb * HW * L * 4 + fpb * L * 4) + 2 * HW * L * 4
        vmem_limit = None
        if est_vmem > (14 << 20):
            vmem_limit = min(est_vmem + (2 << 20), 64 << 20)

        packed = pl.pallas_call(
            _rope_pack_kernel,
            out_shape=jax.ShapeDtypeStruct((ppf, HW, L), jnp.float32),
            grid=grid,
            in_specs=[
                # tf: per-step block; last-two dims (1, L) == full dims -> always legal.
                pl.BlockSpec((fpb, 1, L), lambda i: (i, 0, 0)),
                # hw: resident (constant index map -> no per-step DMA).
                pl.BlockSpec((HW, L), lambda i: (0, 0)),
            ],
            # Output block's last-two dims equal the full array dims -> dense stores
            # whenever HW % 8 == 0 and L % 128 == 0 (true for real Wan shapes).
            out_specs=pl.BlockSpec((fpb, HW, L), lambda i: (i, 0, 0)),
            compiler_params=pltpu.CompilerParams(
                dimension_semantics=("parallel",),
                vmem_limit_bytes=vmem_limit),
        )(tf, hw)

        # packed[..., :half] = cos, packed[..., half:] = sin (contiguous slices,
        # no stride-2 lane gathers).
        # TODO(synk): Mosaic has no complex dtype; the final complex64 packing is a
        # one-time (cached per shape) XLA op outside the kernel.
        freqs = jax.lax.complex(packed[..., :half], packed[..., half:])
        return freqs.reshape(1, 1, ppf * HW, half)

    def __call__(self, hidden_states: jax.Array) -> jax.Array:
        _, _, f, h, w = hidden_states.shape
        p_t, p_h, p_w = self.patch_size
        key = (f // p_t, h // p_h, w // p_w)
        if key not in self._freqs_cache:
            # Bound the cache so device buffers aren't pinned for every shape ever seen.
            if len(self._freqs_cache) >= 16:
                self._freqs_cache.pop(next(iter(self._freqs_cache)))
            self._freqs_cache[key] = self._compute_freqs(*key)
        return self._freqs_cache[key]


def _reference_numpy(head_dim, patch_size, max_seq_len, theta, hs_shape):
    """Pure-numpy transcription of the torch forward (for verification)."""
    h_dim = w_dim = 2 * (head_dim // 6)
    t_dim = head_dim - h_dim - w_dim
    tabs = [np.exp(1j * _rope_angle_table(d, max_seq_len, theta)).astype(np.complex64)
            for d in (t_dim, h_dim, w_dim)]
    _, _, f, h, w = hs_shape
    p_t, p_h, p_w = patch_size
    ppf, pph, ppw = f // p_t, h // p_h, w // p_w
    ff = np.broadcast_to(tabs[0][:ppf].reshape(ppf, 1, 1, -1), (ppf, pph, ppw, t_dim // 2))
    fh = np.broadcast_to(tabs[1][:pph].reshape(1, pph, 1, -1), (ppf, pph, ppw, h_dim // 2))
    fw = np.broadcast_to(tabs[2][:ppw].reshape(1, 1, ppw, -1), (ppf, pph, ppw, w_dim // 2))
    return np.concatenate([ff, fh, fw], axis=-1).reshape(1, 1, ppf * pph * ppw, -1)


if __name__ == "__main__":
    attention_head_dim = 32          # t_dim=12, h_dim=w_dim=10 -> head_dim//2 = 16
    patch_size = (2, 4, 4)
    max_seq_len = 32
    theta = 10000.0

    key = jax.random.PRNGKey(0)
    # hidden_states: (B, C, F, H, W) -- NCDHW; only its shape matters to the module.
    hidden_states = jax.random.normal(key, (2, 4, 4, 16, 16), dtype=jnp.float32)

    mod = WanRotaryPosEmbedPallas(attention_head_dim, patch_size, max_seq_len, theta)
    out = jax.block_until_ready(mod(hidden_states))
    out2 = jax.block_until_ready(mod(hidden_states))   # exercises the shape cache

    ref = _reference_numpy(attention_head_dim, patch_size, max_seq_len, theta,
                           hidden_states.shape)
    assert out.shape == ref.shape, (out.shape, ref.shape)
    assert out.dtype == jnp.complex64, out.dtype
    np.testing.assert_allclose(np.asarray(out), ref, rtol=1e-5, atol=1e-5)
    np.testing.assert_allclose(np.asarray(out2), ref, rtol=1e-5, atol=1e-5)

    print("KERNEL_OK")
</pallas_src>

<mosaic_0001>
module attributes {stable_mosaic.version = 11 : i64} {
  func.func @_rope_pack_kernel(%arg0: i32, %arg1: memref<2x1x32xf32, #tpu.memory_space<vmem>>, %arg2: memref<16x32xf32, #tpu.memory_space<vmem>>, %arg3: memref<2x16x32xf32, #tpu.memory_space<vmem>>) attributes {dimension_semantics = [#tpu.dimension_semantics<parallel>], iteration_bounds = array<i64: 1>, scalar_prefetch = 0 : i64, scratch_operands = 0 : i64, tpu.core_type = #tpu.core_type<tc>, window_params = [{transform_indices = @transform_0, window_bounds = array<i64: 2, 1, 32>}, {pipeline_mode = #tpu.pipeline_mode<synchronous>, transform_indices = @transform_1, window_bounds = array<i64: 16, 32>}, {transform_indices = @transform_2, window_bounds = array<i64: 2, 16, 32>}]} {
    %c0 = arith.constant 0 : index
    %c0_0 = arith.constant 0 : index
    %c0_1 = arith.constant 0 : index
    %0 = vector.load %arg1[%c0, %c0_0, %c0_1] : memref<2x1x32xf32, #tpu.memory_space<vmem>>, vector<2x1x32xf32>
    %c0_2 = arith.constant 0 : index
    %c0_3 = arith.constant 0 : index
    %1 = vector.load %arg2[%c0_2, %c0_3] : memref<16x32xf32, #tpu.memory_space<vmem>>, vector<16x32xf32>
    %2 = vector.shape_cast %1 : vector<16x32xf32> to vector<1x16x32xf32>
    %3 = vector.broadcast %0 : vector<2x1x32xf32> to vector<2x16x32xf32>
    %4 = vector.broadcast %2 : vector<1x16x32xf32> to vector<2x16x32xf32>
    %5 = arith.addf %3, %4 : vector<2x16x32xf32>
    %c0_4 = arith.constant 0 : index
    %c0_5 = arith.constant 0 : index
    %c0_6 = arith.constant 0 : index
    %6 = vector.load %arg3[%c0_4, %c0_5, %c0_6] : memref<2x16x32xf32, #tpu.memory_space<vmem>>, vector<2x16x32xf32>
    tpu.vector_store %arg3[%c0_4, %c0_5, %c0_6], %5 {strides = array<i32>} : memref<2x16x32xf32, #tpu.memory_space<vmem>>, vector<2x16x32xf32>,
    return
  }
  func.func @transform_0(%arg0: i32) -> (i32, i32, i32) {
    %c0_i32 = arith.constant 0 : i32
    %c0_i32_0 = arith.constant 0 : i32
    %c0_i32_1 = arith.constant 0 : i32
    return %arg0, %c0_i32, %c0_i32_0 : i32, i32, i32
  }
  func.func @transform_1(%arg0: i32) -> (i32, i32) {
    %c0_i32 = arith.constant 0 : i32
    %c0_i32_0 = arith.constant 0 : i32
    %c0_i32_1 = arith.constant 0 : i32
    return %c0_i32, %c0_i32_0 : i32, i32
  }
  func.func @transform_2(%arg0: i32) -> (i32, i32, i32) {
    %c0_i32 = arith.constant 0 : i32
    %c0_i32_0 = arith.constant 0 : i32
    %c0_i32_1 = arith.constant 0 : i32
    return %arg0, %c0_i32, %c0_i32_0 : i32, i32, i32
  }
}

</mosaic_0001>

<llo_original>
// kernel: tpu_custom_call.1
$region0: #{tpu_custom_call.1}
  #allocation0 [shape = 'u32[]', space=smem, size = 0x4, offset = 0x4, fixed_abs, tag = 'smem constant byte address 0x4 - core index']
  #allocation1 [shape = 'u32[144,128]{1,0:T(1,128)}', space=vmem, size = 0x12000, scoped, tag = 'internal scratch']
  %s0 = inlined_call_operand.hbm [shape: f32[2,1,32], index: 0, kind: input, shape index: {}]
  %s1 = inlined_call_operand.hbm [shape: f32[16,32], index: 1, kind: input, shape index: {}]
  %s2 = inlined_call_operand.hbm [shape: f32[2,16,32], index: 2, kind: output, shape index: {}]
  %s3 = sld [smem:[#allocation0]]
  $region26: #{tpu_custom_call.1} parent=0
    _
  %s5 = ssub.s32 1, %s3
  %s6 = scalar_select 0, %s5, %s3
  $region1: #{tpu_custom_call.1} parent=0
    #allocation2 [shape = 'u8[1024]{0}', space=vmem, size = 0x400, scoped, tag = 'input window, operand 0, single buffered']
    #allocation3 [shape = 's32[1]{0}', space=sflag, size = 0x4, scoped, tag = 'scoped memory for tpu_custom_call.1']
    #allocation4 [shape = 's32[1]{0}', space=sflag, size = 0x4, scoped, tag = 'scoped memory for tpu_custom_call.1']
    #allocation5 [shape = 'u8[8192]{0}', space=vmem, size = 0x2000, scoped, tag = 'input window, operand 1, single buffered']
    #allocation6 [shape = 's32[1]{0}', space=sflag, size = 0x4, scoped, tag = 'scoped memory for tpu_custom_call.1']
    #allocation7 [shape = 'u8[16384]{0}', space=vmem, size = 0x4000, scoped, tag = 'output window, operand 0, single buffered']
    %7 = vsyncpa [#allocation3], 0
    %8 = vsyncpa [#allocation6], 0
    %9 = vsyncpa [#allocation4], 0
    // Predicated region
    $region2: #{tpu_custom_call.1} parent=1 // pred_check
      _
    $region3: #{tpu_custom_call.1} parent=1 // pred_check_branch
      %11 = sbr.rel (0) target = $region5
    $region4: #{tpu_custom_call.1} parent=1 // pred_region
      %s13 = ssub.s32 32, 32
      %14 = vsyncadd [#allocation3], %s13
      %s15 = sshll.u32 [#allocation2], 4
      %s16 = int_to_ptr.vmem [resolvable:$true] %s15
      %21 = dma.hbm_to_vmem [thread:$0]  %s0, 32, %s16, [#allocation3], 16, 16, 1
    $region5: #{tpu_custom_call.1} parent=1 // pred_fallthru
      _
    // Predicated region
    $region6: #{tpu_custom_call.1} parent=1 // pred_check
      _
    $region7: #{tpu_custom_call.1} parent=1 // pred_check_branch
      %23 = sbr.rel (0) target = $region9
    $region8: #{tpu_custom_call.1} parent=1 // pred_region
      %s25 = ssub.s32 256, 256
      %26 = vsyncadd [#allocation6], %s25
      %s27 = sshll.u32 [#allocation5], 4
      %s28 = int_to_ptr.vmem [resolvable:$true] %s27
      %33 = dma.hbm_to_vmem [thread:$0]  %s1, 256, %s28, [#allocation6], 128, 128, 8
    $region9: #{tpu_custom_call.1} parent=1 // pred_fallthru
      _
    // Predicated region
    $region10: #{tpu_custom_call.1} parent=1 // pred_check
      _
    $region11: #{tpu_custom_call.1} parent=1 // pred_check_branch
      %35 = sbr.rel (0) target = $region13
    $region12: #{tpu_custom_call.1} parent=1 // pred_region
      %36 = dma.done [#allocation3], 32
    $region13: #{tpu_custom_call.1} parent=1 // pred_fallthru
      _
    // Predicated region
    $region14: #{tpu_custom_call.1} parent=1 // pred_check
      _
    $region15: #{tpu_custom_call.1} parent=1 // pred_check_branch
      %38 = sbr.rel (0) target = $region17
    $region16: #{tpu_custom_call.1} parent=1 // pred_region
      %39 = dma.done [#allocation6], 256
    $region17: #{tpu_custom_call.1} parent=1 // pred_fallthru
      _
    %v40 = vld [vmem:[#allocation2] sm:$0x1]
    %v41 = vld [vmem:[#allocation2 + $0x1] sm:$0x1]
    %v42 = vld [vmem:[#allocation5] sm:$0xff]
    %v43 = vld [vmem:[#allocation5 + $0x8] sm:$0xff]
    %v46 = vlaneseq
    %v47 = vshrl.u32 %v46, 7
    %v48 = vsub.s32 0, %v47
    %v49 = vrot.slane %v40, %v48
    %v50 = vlaneseq
    %v51 = vshrl.u32 %v50, 7
    %v52 = vsub.s32 0, %v51
    %v53 = vrot.slane %v41, %v52
    %v56 = vadd.f32 %v49, %v42
    %v57 = vadd.f32 %v49, %v43
    %v58 = vadd.f32 %v53, %v42
    %v59 = vadd.f32 %v53, %v43
    %vm60 = vcmask 261120
    %61 = vst.msk [vmem:[#allocation7] sm:$0xff] %vm60, %v56
    %62 = vst.msk [vmem:[#allocation7 + $0x8] sm:$0xff] %vm60, %v57
    %63 = vst.msk [vmem:[#allocation7 + $0x10] sm:$0xff] %vm60, %v58
    %64 = vst.msk [vmem:[#allocation7 + $0x18] sm:$0xff] %vm60, %v59
    // Predicated region
    $region18: #{tpu_custom_call.1} parent=1 // pred_check
      _
    $region19: #{tpu_custom_call.1} parent=1 // pred_check_branch
      %66 = sbr.rel (0) target = $region21
    $region20: #{tpu_custom_call.1} parent=1 // pred_region
      %s68 = ssub.s32 512, 512
      %69 = vsyncadd [#allocation4], %s68
      %s70 = sshll.u32 [#allocation7], 4
      %s71 = int_to_ptr.vmem [resolvable:$true] %s70
      %76 = dma.vmem_to_hbm [thread:$0]  %s71, 512, %s2, [#allocation4], 128, 128, 8
    $region21: #{tpu_custom_call.1} parent=1 // pred_fallthru
      _
    // Predicated region
    $region22: #{tpu_custom_call.1} parent=1 // pred_check
      _
    $region23: #{tpu_custom_call.1} parent=1 // pred_check_branch
      %78 = sbr.rel (0) target = $region25
    $region24: #{tpu_custom_call.1} parent=1 // pred_region
      %79 = dma.done [#allocation4], 512
    $region25: #{tpu_custom_call.1} parent=1 // pred_fallthru
      _
    %80 = vsyncpa [#allocation3], 1
    %81 = vsyncpa [#allocation6], 1
    %82 = vsyncpa [#allocation4], 1

</llo_original>
